<compile_context>
chip_gen: v5e
topology: v5e:2x2
jax: 0.10.0
libtpu: 0.0.40
codegen_flags: <defaults>
</compile_context>

<pallas_src>
import functools

import jax
import jax.numpy as jnp
from jax.experimental import pallas as pl
from jax.experimental.pallas import tpu as pltpu


def _self_attention_kernel(q_ref, k_ref, v_ref,
                           wq_ref, wk_ref, wv_ref, wo_ref, bo_ref, hm_ref,
                           o_ref, *, heads, scale):
    nb, Sq, E = q_ref.shape
    Sk = k_ref.shape[1]
    H = heads

    # --- projections: per-head Linear(D, D) == one block-diagonal (E, E) matmul
    # in (rows, E) layout; batch folded into rows, E dense on the lane axis.
    q2 = q_ref[...].reshape(nb * Sq, E)
    k2 = k_ref[...].reshape(nb * Sk, E)
    v2 = v_ref[...].reshape(nb * Sk, E)

    qh = jnp.dot(q2, wq_ref[...], preferred_element_type=jnp.float32) * scale
    kh = jnp.dot(k2, wk_ref[...], preferred_element_type=jnp.float32)
    vh = jnp.dot(v2, wv_ref[...], preferred_element_type=jnp.float32)

    qh3 = qh.reshape(nb, Sq, E)
    kh3 = kh.reshape(nb, Sk, E)
    vh3 = vh.reshape(nb, Sk, E)

    # --- head-expanded queries: row j = h*Sq + q holds qh masked to head h's
    # lanes, so a full-E contraction against K only picks up that head's dims.
    hm_all = hm_ref[...]                                   # (H, 1, E)
    hm = [hm_all[h] for h in range(H)]                     # each (1, E)
    q_big = jnp.concatenate([qh3 * hm[h] for h in range(H)], axis=1)   # (nb, H*Sq, E)

    # --- scores + per-row (per n, h, q) softmax over the key axis.
    energy = jnp.einsum('nje,nke->njk', q_big, kh3,
                        preferred_element_type=jnp.float32)            # (nb, H*Sq, Sk)
    m = jnp.max(energy, axis=-1, keepdims=True)
    p = jnp.exp(energy - m)
    attn = p * pl.reciprocal(jnp.sum(p, axis=-1, keepdims=True), approx=True)

    # --- attention-weighted values (full E lanes per (h, q) row) ...
    ob = jnp.einsum('njk,nke->nje', attn, vh3,
                    preferred_element_type=jnp.float32)                # (nb, H*Sq, E)

    # --- ... then fold heads back onto the lane axis:
    #     out[n, q, e] = ob[n, (e // D) * Sq + q, e]
    oh = ob[:, 0:Sq, :] * hm[0]
    for h in range(1, H):
        oh = oh + ob[:, h * Sq:(h + 1) * Sq, :] * hm[h]                # (nb, Sq, E)

    # --- fc_out: one (rows, E) @ (E, E) matmul + bias.
    out = jnp.dot(oh.reshape(nb * Sq, E), wo_ref[...],
                  preferred_element_type=jnp.float32) + bo_ref[...]
    o_ref[...] = out.reshape(nb, Sq, E).astype(o_ref.dtype)


def prepare_params(wv, wk, wq, wo, bo, *, heads):
    """One-time weight prep, hoisted out of the per-call path (call at init)."""
    D = wq.shape[0]
    E = heads * D
    assert wv.shape == (D, D) and wk.shape == (D, D) and wq.shape == (D, D)
    assert wo.shape == (E, E) and bo.shape == (E,)
    eye_h = jnp.eye(heads, dtype=wq.dtype)
    wq_bd = jnp.kron(eye_h, wq.T)            # (E, E) block-diagonal: x @ Wq.T per head
    wk_bd = jnp.kron(eye_h, wk.T)
    wv_bd = jnp.kron(eye_h, wv.T)
    wo_t = wo.T                              # (E, E): out @ Wo.T
    bo2 = bo.reshape(1, E)
    lane_head = jnp.arange(E, dtype=jnp.int32) // D
    hm = (lane_head[None, None, :] ==
          jnp.arange(heads, dtype=jnp.int32)[:, None, None]).astype(wq.dtype)  # (H,1,E)
    return dict(wq=wq_bd, wk=wk_bd, wv=wv_bd, wo=wo_t, bo=bo2, hm=hm,
                heads=heads, emb=E)


def self_attention(values, keys, query, params, mask=None, *, block_n=None):
    """values/keys: (N, Sk, E); query: (N, Sq, E); returns (N, Sq, E) float32."""
    # TODO(synk): attention mask (masked_fill) path not implemented.
    assert mask is None, "attention mask is not implemented (mask=None only)"
    H = params['heads']
    E = params['emb']
    N, Sq, Eq = query.shape
    _, Sk, _ = keys.shape
    assert values.shape == keys.shape and Eq == E

    if block_n is None:
        block_n = N                 # single grid step (best on single-TC v5e/v6e)
    assert N % block_n == 0
    grid = (N // block_n,)
    scale = 1.0 / (float(E) ** 0.5)

    kernel = functools.partial(_self_attention_kernel, heads=H, scale=scale)

    return pl.pallas_call(
        kernel,
        out_shape=jax.ShapeDtypeStruct((N, Sq, E), jnp.float32),
        grid_spec=pltpu.PrefetchScalarGridSpec(
            num_scalar_prefetch=0,
            grid=grid,
            in_specs=[
                pl.BlockSpec((block_n, Sq, E), lambda b: (b, 0, 0)),   # query
                pl.BlockSpec((block_n, Sk, E), lambda b: (b, 0, 0)),   # keys
                pl.BlockSpec((block_n, Sk, E), lambda b: (b, 0, 0)),   # values
                pl.BlockSpec((E, E), lambda b: (0, 0)),                # Wq block-diag
                pl.BlockSpec((E, E), lambda b: (0, 0)),                # Wk block-diag
                pl.BlockSpec((E, E), lambda b: (0, 0)),                # Wv block-diag
                pl.BlockSpec((E, E), lambda b: (0, 0)),                # Wo^T
                pl.BlockSpec((1, E), lambda b: (0, 0)),                # bias
                pl.BlockSpec((H, 1, E), lambda b: (0, 0, 0)),          # head lane masks
            ],
            out_specs=pl.BlockSpec((block_n, Sq, E), lambda b: (b, 0, 0)),
        ),
        compiler_params=pltpu.CompilerParams(
            dimension_semantics=("parallel",)),
    )(query, keys, values, params['wq'], params['wk'], params['wv'],
      params['wo'], params['bo'], params['hm'])


def _reference(values, keys, query, wv, wk, wq, wo, bo, *, heads):
    """Pure-JAX reference implementing the intended PyTorch forward."""
    N, Sq, E = query.shape
    Sk = keys.shape[1]
    D = E // heads
    v = values.reshape(N, Sk, heads, D) @ wv.T
    k = keys.reshape(N, Sk, heads, D) @ wk.T
    q = query.reshape(N, Sq, heads, D) @ wq.T
    energy = jnp.einsum("nqhd,nkhd->nhqk", q, k)
    attn = jax.nn.softmax(energy / (E ** 0.5), axis=3)
    out = jnp.einsum("nhqk,nkhd->nqhd", attn, v).reshape(N, Sq, E)
    return out @ wo.T + bo


if __name__ == "__main__":
    # Small shapes consistent with the module: emb_size=32, heads=4 -> head_dim=8
    N, S, E, H = 2, 8, 32, 4
    D = E // H

    key = jax.random.PRNGKey(0)
    k1, k2, k3, k4, k5, k6, k7, k8 = jax.random.split(key, 8)

    values = jax.random.normal(k1, (N, S, E), dtype=jnp.float32)
    keys_in = jax.random.normal(k2, (N, S, E), dtype=jnp.float32)
    query = jax.random.normal(k3, (N, S, E), dtype=jnp.float32)

    # Deterministic synthetic parameters (shapes match the nn.Linear weights).
    wv = jax.random.normal(k4, (D, D), dtype=jnp.float32) * 0.1
    wk = jax.random.normal(k5, (D, D), dtype=jnp.float32) * 0.1
    wq = jax.random.normal(k6, (D, D), dtype=jnp.float32) * 0.1
    wo = jax.random.normal(k7, (E, E), dtype=jnp.float32) * 0.1
    bo = jax.random.normal(k8, (E,), dtype=jnp.float32) * 0.1

    # One-time parameter prep (hoisted out of the per-call path).
    params = prepare_params(wv, wk, wq, wo, bo, heads=H)
    params = jax.tree_util.tree_map(
        lambda x: jax.block_until_ready(x) if isinstance(x, jax.Array) else x, params)

    out = self_attention(values, keys_in, query, params)
    out = jax.block_until_ready(out)

    ref = _reference(values, keys_in, query, wv, wk, wq, wo, bo, heads=H)
    assert out.shape == (N, S, E)
    # Tolerance accounts for the EUP approximate reciprocal in the softmax denom.
    assert jnp.allclose(out, ref, atol=2e-3, rtol=2e-3), "mismatch vs JAX reference"

    print("KERNEL_OK")
</pallas_src>

<mosaic_0001>
module attributes {stable_mosaic.version = 11 : i64} {
  func.func @_self_attention_kernel(%arg0: i32, %arg1: memref<2x8x32xf32, #tpu.memory_space<vmem>>, %arg2: memref<2x8x32xf32, #tpu.memory_space<vmem>>, %arg3: memref<2x8x32xf32, #tpu.memory_space<vmem>>, %arg4: memref<32x32xf32, #tpu.memory_space<vmem>>, %arg5: memref<32x32xf32, #tpu.memory_space<vmem>>, %arg6: memref<32x32xf32, #tpu.memory_space<vmem>>, %arg7: memref<32x32xf32, #tpu.memory_space<vmem>>, %arg8: memref<1x32xf32, #tpu.memory_space<vmem>>, %arg9: memref<4x1x32xf32, #tpu.memory_space<vmem>>, %arg10: memref<2x8x32xf32, #tpu.memory_space<vmem>>) attributes {dimension_semantics = [#tpu.dimension_semantics<parallel>], iteration_bounds = array<i64: 1>, scalar_prefetch = 0 : i64, scratch_operands = 0 : i64, tpu.core_type = #tpu.core_type<tc>, window_params = [{transform_indices = @transform_0, window_bounds = array<i64: 2, 8, 32>}, {transform_indices = @transform_1, window_bounds = array<i64: 2, 8, 32>}, {transform_indices = @transform_2, window_bounds = array<i64: 2, 8, 32>}, {pipeline_mode = #tpu.pipeline_mode<synchronous>, transform_indices = @transform_3, window_bounds = array<i64: 32, 32>}, {pipeline_mode = #tpu.pipeline_mode<synchronous>, transform_indices = @transform_4, window_bounds = array<i64: 32, 32>}, {pipeline_mode = #tpu.pipeline_mode<synchronous>, transform_indices = @transform_5, window_bounds = array<i64: 32, 32>}, {pipeline_mode = #tpu.pipeline_mode<synchronous>, transform_indices = @transform_6, window_bounds = array<i64: 32, 32>}, {pipeline_mode = #tpu.pipeline_mode<synchronous>, transform_indices = @transform_7, window_bounds = array<i64: 1, 32>}, {pipeline_mode = #tpu.pipeline_mode<synchronous>, transform_indices = @transform_8, window_bounds = array<i64: 4, 1, 32>}, {transform_indices = @transform_9, window_bounds = array<i64: 2, 8, 32>}]} {
    %c0 = arith.constant 0 : index
    %c0_0 = arith.constant 0 : index
    %c0_1 = arith.constant 0 : index
    %0 = vector.load %arg1[%c0, %c0_0, %c0_1] : memref<2x8x32xf32, #tpu.memory_space<vmem>>, vector<2x8x32xf32>
    %1 = vector.shape_cast %0 : vector<2x8x32xf32> to vector<16x32xf32>
    %c0_2 = arith.constant 0 : index
    %c0_3 = arith.constant 0 : index
    %c0_4 = arith.constant 0 : index
    %2 = vector.load %arg2[%c0_2, %c0_3, %c0_4] : memref<2x8x32xf32, #tpu.memory_space<vmem>>, vector<2x8x32xf32>
    %3 = vector.shape_cast %2 : vector<2x8x32xf32> to vector<16x32xf32>
    %c0_5 = arith.constant 0 : index
    %c0_6 = arith.constant 0 : index
    %c0_7 = arith.constant 0 : index
    %4 = vector.load %arg3[%c0_5, %c0_6, %c0_7] : memref<2x8x32xf32, #tpu.memory_space<vmem>>, vector<2x8x32xf32>
    %5 = vector.shape_cast %4 : vector<2x8x32xf32> to vector<16x32xf32>
    %c0_8 = arith.constant 0 : index
    %c0_9 = arith.constant 0 : index
    %6 = vector.load %arg4[%c0_8, %c0_9] : memref<32x32xf32, #tpu.memory_space<vmem>>, vector<32x32xf32>
    %cst = arith.constant dense<0.000000e+00> : vector<16x32xf32>
    %7 = tpu.matmul %1, %6, %cst {dimension_numbers = #tpu.dot_dimension_numbers<[1], [0], [0], [1], [0, 0, 1, 1], [], []>} : vector<16x32xf32>, vector<32x32xf32>, vector<16x32xf32> -> vector<16x32xf32>
    %cst_10 = arith.constant 0.176776692 : f32
    %8 = vector.broadcast %cst_10 : f32 to vector<16x32xf32>
    %9 = arith.mulf %7, %8 : vector<16x32xf32>
    %c0_11 = arith.constant 0 : index
    %c0_12 = arith.constant 0 : index
    %10 = vector.load %arg5[%c0_11, %c0_12] : memref<32x32xf32, #tpu.memory_space<vmem>>, vector<32x32xf32>
    %cst_13 = arith.constant dense<0.000000e+00> : vector<16x32xf32>
    %11 = tpu.matmul %3, %10, %cst_13 {dimension_numbers = #tpu.dot_dimension_numbers<[1], [0], [0], [1], [0, 0, 1, 1], [], []>} : vector<16x32xf32>, vector<32x32xf32>, vector<16x32xf32> -> vector<16x32xf32>
    %c0_14 = arith.constant 0 : index
    %c0_15 = arith.constant 0 : index
    %12 = vector.load %arg6[%c0_14, %c0_15] : memref<32x32xf32, #tpu.memory_space<vmem>>, vector<32x32xf32>
    %cst_16 = arith.constant dense<0.000000e+00> : vector<16x32xf32>
    %13 = tpu.matmul %5, %12, %cst_16 {dimension_numbers = #tpu.dot_dimension_numbers<[1], [0], [0], [1], [0, 0, 1, 1], [], []>} : vector<16x32xf32>, vector<32x32xf32>, vector<16x32xf32> -> vector<16x32xf32>
    %14 = vector.shape_cast %9 : vector<16x32xf32> to vector<2x8x32xf32>
    %15 = vector.shape_cast %11 : vector<16x32xf32> to vector<2x8x32xf32>
    %16 = vector.shape_cast %13 : vector<16x32xf32> to vector<2x8x32xf32>
    %c0_17 = arith.constant 0 : index
    %c0_18 = arith.constant 0 : index
    %c0_19 = arith.constant 0 : index
    %17 = vector.load %arg9[%c0_17, %c0_18, %c0_19] : memref<4x1x32xf32, #tpu.memory_space<vmem>>, vector<4x1x32xf32>
    %18 = vector.extract_strided_slice %17 {offsets = [0, 0, 0], sizes = [1, 1, 32], strides = [1, 1, 1]} : vector<4x1x32xf32> to vector<1x1x32xf32>
    %19 = vector.shape_cast %18 : vector<1x1x32xf32> to vector<1x32xf32>
    %20 = vector.extract_strided_slice %17 {offsets = [1, 0, 0], sizes = [1, 1, 32], strides = [1, 1, 1]} : vector<4x1x32xf32> to vector<1x1x32xf32>
    %21 = vector.shape_cast %20 : vector<1x1x32xf32> to vector<1x32xf32>
    %22 = vector.extract_strided_slice %17 {offsets = [2, 0, 0], sizes = [1, 1, 32], strides = [1, 1, 1]} : vector<4x1x32xf32> to vector<1x1x32xf32>
    %23 = vector.shape_cast %22 : vector<1x1x32xf32> to vector<1x32xf32>
    %24 = vector.extract_strided_slice %17 {offsets = [3, 0, 0], sizes = [1, 1, 32], strides = [1, 1, 1]} : vector<4x1x32xf32> to vector<1x1x32xf32>
    %25 = vector.shape_cast %24 : vector<1x1x32xf32> to vector<1x32xf32>
    %26 = vector.shape_cast %19 : vector<1x32xf32> to vector<1x1x32xf32>
    %27 = vector.broadcast %26 : vector<1x1x32xf32> to vector<2x8x32xf32>
    %28 = arith.mulf %14, %27 : vector<2x8x32xf32>
    %29 = vector.shape_cast %21 : vector<1x32xf32> to vector<1x1x32xf32>
    %30 = vector.broadcast %29 : vector<1x1x32xf32> to vector<2x8x32xf32>
    %31 = arith.mulf %14, %30 : vector<2x8x32xf32>
    %32 = vector.shape_cast %23 : vector<1x32xf32> to vector<1x1x32xf32>
    %33 = vector.broadcast %32 : vector<1x1x32xf32> to vector<2x8x32xf32>
    %34 = arith.mulf %14, %33 : vector<2x8x32xf32>
    %35 = vector.shape_cast %25 : vector<1x32xf32> to vector<1x1x32xf32>
    %36 = vector.broadcast %35 : vector<1x1x32xf32> to vector<2x8x32xf32>
    %37 = arith.mulf %14, %36 : vector<2x8x32xf32>
    %38 = tpu.concatenate %28, %31, %34, %37 in 1 : vector<2x8x32xf32>, vector<2x8x32xf32>, vector<2x8x32xf32>, vector<2x8x32xf32> -> vector<2x32x32xf32>
    "tpu.trace_start"() <{level = 10 : i32, message = "nje,nke->njk"}> : () -> ()
    %cst_20 = arith.constant dense<0.000000e+00> : vector<2x32x8xf32>
    %39 = tpu.matmul %38, %15, %cst_20 {dimension_numbers = #tpu.dot_dimension_numbers<[2], [2], [1], [1], [0, 0, 0, 1, 1, 1], [0], [0]>} : vector<2x32x32xf32>, vector<2x8x32xf32>, vector<2x32x8xf32> -> vector<2x32x8xf32>
    "tpu.trace_stop"() : () -> ()
    %cst_21 = arith.constant dense<0xFF800000> : vector<2x32xf32>
    %40 = vector.multi_reduction <maximumf>, %39, %cst_21 [2] : vector<2x32x8xf32> to vector<2x32xf32>
    %41 = vector.shape_cast %40 : vector<2x32xf32> to vector<2x32x1xf32>
    %42 = vector.broadcast %41 : vector<2x32x1xf32> to vector<2x32x8xf32>
    %43 = arith.subf %39, %42 : vector<2x32x8xf32>
    %44 = math.exp %43 : vector<2x32x8xf32>
    %cst_22 = arith.constant dense<0.000000e+00> : vector<2x32xf32>
    %45 = vector.multi_reduction <add>, %44, %cst_22 [2] : vector<2x32x8xf32> to vector<2x32xf32>
    %46 = vector.shape_cast %45 : vector<2x32xf32> to vector<2x32x1xf32>
    %47 = tpu.reciprocal %46 {approx = true} : vector<2x32x1xf32> -> vector<2x32x1xf32>
    %48 = vector.broadcast %47 : vector<2x32x1xf32> to vector<2x32x8xf32>
    %49 = arith.mulf %44, %48 : vector<2x32x8xf32>
    "tpu.trace_start"() <{level = 10 : i32, message = "njk,nke->nje"}> : () -> ()
    %cst_23 = arith.constant dense<0.000000e+00> : vector<2x32x32xf32>
    %50 = tpu.matmul %49, %16, %cst_23 {dimension_numbers = #tpu.dot_dimension_numbers<[2], [1], [1], [2], [0, 0, 0, 1, 1, 2], [0], [0]>} : vector<2x32x8xf32>, vector<2x8x32xf32>, vector<2x32x32xf32> -> vector<2x32x32xf32>
    "tpu.trace_stop"() : () -> ()
    %51 = vector.extract_strided_slice %50 {offsets = [0, 0, 0], sizes = [2, 8, 32], strides = [1, 1, 1]} : vector<2x32x32xf32> to vector<2x8x32xf32>
    %52 = vector.shape_cast %19 : vector<1x32xf32> to vector<1x1x32xf32>
    %53 = vector.broadcast %52 : vector<1x1x32xf32> to vector<2x8x32xf32>
    %54 = arith.mulf %51, %53 : vector<2x8x32xf32>
    %55 = vector.extract_strided_slice %50 {offsets = [0, 8, 0], sizes = [2, 8, 32], strides = [1, 1, 1]} : vector<2x32x32xf32> to vector<2x8x32xf32>
    %56 = vector.shape_cast %21 : vector<1x32xf32> to vector<1x1x32xf32>
    %57 = vector.broadcast %56 : vector<1x1x32xf32> to vector<2x8x32xf32>
    %58 = arith.mulf %55, %57 : vector<2x8x32xf32>
    %59 = arith.addf %54, %58 : vector<2x8x32xf32>
    %60 = vector.extract_strided_slice %50 {offsets = [0, 16, 0], sizes = [2, 8, 32], strides = [1, 1, 1]} : vector<2x32x32xf32> to vector<2x8x32xf32>
    %61 = vector.shape_cast %23 : vector<1x32xf32> to vector<1x1x32xf32>
    %62 = vector.broadcast %61 : vector<1x1x32xf32> to vector<2x8x32xf32>
    %63 = arith.mulf %60, %62 : vector<2x8x32xf32>
    %64 = arith.addf %59, %63 : vector<2x8x32xf32>
    %65 = vector.extract_strided_slice %50 {offsets = [0, 24, 0], sizes = [2, 8, 32], strides = [1, 1, 1]} : vector<2x32x32xf32> to vector<2x8x32xf32>
    %66 = vector.shape_cast %25 : vector<1x32xf32> to vector<1x1x32xf32>
    %67 = vector.broadcast %66 : vector<1x1x32xf32> to vector<2x8x32xf32>
    %68 = arith.mulf %65, %67 : vector<2x8x32xf32>
    %69 = arith.addf %64, %68 : vector<2x8x32xf32>
    %70 = vector.shape_cast %69 : vector<2x8x32xf32> to vector<16x32xf32>
    %c0_24 = arith.constant 0 : index
    %c0_25 = arith.constant 0 : index
    %71 = vector.load %arg7[%c0_24, %c0_25] : memref<32x32xf32, #tpu.memory_space<vmem>>, vector<32x32xf32>
    %cst_26 = arith.constant dense<0.000000e+00> : vector<16x32xf32>
    %72 = tpu.matmul %70, %71, %cst_26 {dimension_numbers = #tpu.dot_dimension_numbers<[1], [0], [0], [1], [0, 0, 1, 1], [], []>} : vector<16x32xf32>, vector<32x32xf32>, vector<16x32xf32> -> vector<16x32xf32>
    %c0_27 = arith.constant 0 : index
    %c0_28 = arith.constant 0 : index
    %73 = vector.load %arg8[%c0_27, %c0_28] : memref<1x32xf32, #tpu.memory_space<vmem>>, vector<1x32xf32>
    %74 = vector.broadcast %73 : vector<1x32xf32> to vector<16x32xf32>
    %75 = arith.addf %72, %74 : vector<16x32xf32>
    %76 = vector.shape_cast %75 : vector<16x32xf32> to vector<2x8x32xf32>
    %c0_29 = arith.constant 0 : index
    %c0_30 = arith.constant 0 : index
    %c0_31 = arith.constant 0 : index
    %77 = vector.load %arg10[%c0_29, %c0_30, %c0_31] : memref<2x8x32xf32, #tpu.memory_space<vmem>>, vector<2x8x32xf32>
    tpu.vector_store %arg10[%c0_29, %c0_30, %c0_31], %76 {strides = array<i32>} : memref<2x8x32xf32, #tpu.memory_space<vmem>>, vector<2x8x32xf32>,
    return
  }
  func.func @transform_0(%arg0: i32) -> (i32, i32, i32) {
    %c0_i32 = arith.constant 0 : i32
    %c0_i32_0 = arith.constant 0 : i32
    %c0_i32_1 = arith.constant 0 : i32
    return %arg0, %c0_i32, %c0_i32_0 : i32, i32, i32
  }
  func.func @transform_1(%arg0: i32) -> (i32, i32, i32) {
    %c0_i32 = arith.constant 0 : i32
    %c0_i32_0 = arith.constant 0 : i32
    %c0_i32_1 = arith.constant 0 : i32
    return %arg0, %c0_i32, %c0_i32_0 : i32, i32, i32
  }
  func.func @transform_2(%arg0: i32) -> (i32, i32, i32) {
    %c0_i32 = arith.constant 0 : i32
    %c0_i32_0 = arith.constant 0 : i32
    %c0_i32_1 = arith.constant 0 : i32
    return %arg0, %c0_i32, %c0_i32_0 : i32, i32, i32
  }
  func.func @transform_3(%arg0: i32) -> (i32, i32) {
    %c0_i32 = arith.constant 0 : i32
    %c0_i32_0 = arith.constant 0 : i32
    %c0_i32_1 = arith.constant 0 : i32
    return %c0_i32, %c0_i32_0 : i32, i32
  }
  func.func @transform_4(%arg0: i32) -> (i32, i32) {
    %c0_i32 = arith.constant 0 : i32
    %c0_i32_0 = arith.constant 0 : i32
    %c0_i32_1 = arith.constant 0 : i32
    return %c0_i32, %c0_i32_0 : i32, i32
  }
  func.func @transform_5(%arg0: i32) -> (i32, i32) {
    %c0_i32 = arith.constant 0 : i32
    %c0_i32_0 = arith.constant 0 : i32
    %c0_i32_1 = arith.constant 0 : i32
    return %c0_i32, %c0_i32_0 : i32, i32
  }
  func.func @transform_6(%arg0: i32) -> (i32, i32) {
    %c0_i32 = arith.constant 0 : i32
    %c0_i32_0 = arith.constant 0 : i32
    %c0_i32_1 = arith.constant 0 : i32
    return %c0_i32, %c0_i32_0 : i32, i32
  }
  func.func @transform_7(%arg0: i32) -> (i32, i32) {
    %c0_i32 = arith.constant 0 : i32
    %c0_i32_0 = arith.constant 0 : i32
    %c0_i32_1 = arith.constant 0 : i32
    return %c0_i32, %c0_i32_0 : i32, i32
  }
  func.func @transform_8(%arg0: i32) -> (i32, i32, i32) {
    %c0_i32 = arith.constant 0 : i32
    %c0_i32_0 = arith.constant 0 : i32
    %c0_i32_1 = arith.constant 0 : i32
    %c0_i32_2 = arith.constant 0 : i32
    return %c0_i32, %c0_i32_0, %c0_i32_1 : i32, i32, i32
  }
  func.func @transform_9(%arg0: i32) -> (i32, i32, i32) {
    %c0_i32 = arith.constant 0 : i32
    %c0_i32_0 = arith.constant 0 : i32
    %c0_i32_1 = arith.constant 0 : i32
    return %arg0, %c0_i32, %c0_i32_0 : i32, i32, i32
  }
}

</mosaic_0001>

<llo_original>
// kernel: tpu_custom_call.1
$region0: #{tpu_custom_call.1}
  #allocation0 [shape = 'u32[]', space=smem, size = 0x4, offset = 0x4, fixed_abs, tag = 'smem constant byte address 0x4 - core index']
  #allocation1 [shape = 'u32[72,128]{1,0:T(1,128)}', space=vmem, size = 0x9000, scoped, tag = 'internal scratch']
  %s0 = inlined_call_operand.hbm [shape: f32[2,8,32], index: 0, kind: input, shape index: {}]
  %s1 = inlined_call_operand.hbm [shape: f32[2,8,32], index: 1, kind: input, shape index: {}]
  %s2 = inlined_call_operand.hbm [shape: f32[2,8,32], index: 2, kind: input, shape index: {}]
  %s3 = inlined_call_operand.hbm [shape: f32[32,32], index: 3, kind: input, shape index: {}]
  %s4 = inlined_call_operand.hbm [shape: f32[32,32], index: 4, kind: input, shape index: {}]
  %s5 = inlined_call_operand.hbm [shape: f32[32,32], index: 5, kind: input, shape index: {}]
  %s6 = inlined_call_operand.hbm [shape: f32[32,32], index: 6, kind: input, shape index: {}]
  %s7 = inlined_call_operand.vmem [shape: f32[1,32], index: 7, kind: input, shape index: {}]
  %s8 = inlined_call_operand.vmem [shape: f32[4,1,32], index: 8, kind: input, shape index: {}]
  %s9 = inlined_call_operand.hbm [shape: f32[2,8,32], index: 9, kind: output, shape index: {}]
  %s10 = sld [smem:[#allocation0]]
  $region74: #{tpu_custom_call.1} parent=0
    _
  %s12 = ssub.s32 1, %s10
  %s13 = scalar_select 0, %s12, %s10
  $region1: #{tpu_custom_call.1} parent=0
    #allocation2 [shape = 'u8[8192]{0}', space=vmem, size = 0x2000, scoped, tag = 'input window, operand 0, single buffered']
    #allocation3 [shape = 's32[1]{0}', space=sflag, size = 0x4, scoped, tag = 'scoped memory for tpu_custom_call.1']
    #allocation4 [shape = 's32[1]{0}', space=sflag, size = 0x4, scoped, tag = 'scoped memory for tpu_custom_call.1']
    #allocation5 [shape = 'u8[8192]{0}', space=vmem, size = 0x2000, scoped, tag = 'input window, operand 1, single buffered']
    #allocation6 [shape = 's32[1]{0}', space=sflag, size = 0x4, scoped, tag = 'scoped memory for tpu_custom_call.1']
    #allocation7 [shape = 'u8[8192]{0}', space=vmem, size = 0x2000, scoped, tag = 'input window, operand 2, single buffered']
    #allocation8 [shape = 'u8[16384]{0}', space=vmem, size = 0x4000, scoped, tag = 'input window, operand 3, single buffered']
    #allocation9 [shape = 's32[1]{0}', space=sflag, size = 0x4, scoped, tag = 'scoped memory for tpu_custom_call.1']
    #allocation10 [shape = 'u8[16384]{0}', space=vmem, size = 0x4000, scoped, tag = 'input window, operand 4, single buffered']
    #allocation11 [shape = 'u8[16384]{0}', space=vmem, size = 0x4000, scoped, tag = 'input window, operand 5, single buffered']
    #allocation12 [shape = 's32[1]{0}', space=sflag, size = 0x4, scoped, tag = 'scoped memory for tpu_custom_call.1']
    #allocation13 [shape = 'u8[16384]{0}', space=vmem, size = 0x4000, scoped, tag = 'input window, operand 6, single buffered']
    #allocation14 [shape = 'u8[8192]{0}', space=vmem, size = 0x2000, scoped, tag = 'output window, operand 0, single buffered']
    %14 = vsyncpa [#allocation3], 0
    %15 = vsyncpa [#allocation6], 0
    %16 = vsyncpa [#allocation9], 0
    %17 = vsyncpa [#allocation12], 0
    %18 = vsyncpa [#allocation4], 0
    // Predicated region
    $region2: #{tpu_custom_call.1} parent=1 // pred_check
      _
    $region3: #{tpu_custom_call.1} parent=1 // pred_check_branch
      %20 = sbr.rel (0) target = $region5
    $region4: #{tpu_custom_call.1} parent=1 // pred_region
      %22 = vsyncadd [#allocation3], 0
      %s23 = sshll.u32 %s0, 4
      %s24 = int_to_ptr.hbm [resolvable:$true] %s23
      %s25 = sshll.u32 [#allocation2], 4
      %s26 = int_to_ptr.vmem [resolvable:$true] %s25
      %31 = dma.hbm_to_vmem [thread:$0]  %s24, 256, %s26, [#allocation3], 128, 128, 8
    $region5: #{tpu_custom_call.1} parent=1 // pred_fallthru
      _
    // Predicated region
    $region6: #{tpu_custom_call.1} parent=1 // pred_check
      _
    $region7: #{tpu_custom_call.1} parent=1 // pred_check_branch
      %33 = sbr.rel (0) target = $region9
    $region8: #{tpu_custom_call.1} parent=1 // pred_region
      %35 = vsyncadd [#allocation6], 0
      %s36 = sshll.u32 %s1, 4
      %s37 = int_to_ptr.hbm [resolvable:$true] %s36
      %s38 = sshll.u32 [#allocation5], 4
      %s39 = int_to_ptr.vmem [resolvable:$true] %s38
      %44 = dma.hbm_to_vmem [thread:$0]  %s37, 256, %s39, [#allocation6], 128, 128, 8
    $region9: #{tpu_custom_call.1} parent=1 // pred_fallthru
      _
    // Predicated region
    $region10: #{tpu_custom_call.1} parent=1 // pred_check
      _
    $region11: #{tpu_custom_call.1} parent=1 // pred_check_branch
      %46 = sbr.rel (0) target = $region13
    $region12: #{tpu_custom_call.1} parent=1 // pred_region
      %48 = vsyncadd [#allocation6], 0
      %s49 = sshll.u32 %s2, 4
      %s50 = int_to_ptr.hbm [resolvable:$true] %s49
      %s51 = sshll.u32 [#allocation7], 4
      %s52 = int_to_ptr.vmem [resolvable:$true] %s51
      %57 = dma.hbm_to_vmem [thread:$0]  %s50, 256, %s52, [#allocation6], 128, 128, 8
    $region13: #{tpu_custom_call.1} parent=1 // pred_fallthru
      _
    // Predicated region
    $region14: #{tpu_custom_call.1} parent=1 // pred_check
      _
    $region15: #{tpu_custom_call.1} parent=1 // pred_check_branch
      %59 = sbr.rel (0) target = $region17
    $region16: #{tpu_custom_call.1} parent=1 // pred_region
      %61 = vsyncadd [#allocation9], 0
      %s62 = sshll.u32 %s3, 4
      %s63 = int_to_ptr.hbm [resolvable:$true] %s62
      %s64 = sshll.u32 [#allocation8], 4
      %s65 = int_to_ptr.vmem [resolvable:$true] %s64
      %70 = dma.hbm_to_vmem [thread:$0]  %s63, 512, %s65, [#allocation9], 128, 128, 8
    $region17: #{tpu_custom_call.1} parent=1 // pred_fallthru
      _
    // Predicated region
    $region18: #{tpu_custom_call.1} parent=1 // pred_check
      _
    $region19: #{tpu_custom_call.1} parent=1 // pred_check_branch
      %72 = sbr.rel (0) target = $region21
    $region20: #{tpu_custom_call.1} parent=1 // pred_region
      %74 = vsyncadd [#allocation9], 0
      %s75 = sshll.u32 %s4, 4
      %s76 = int_to_ptr.hbm [resolvable:$true] %s75
      %s77 = sshll.u32 [#allocation10], 4
      %s78 = int_to_ptr.vmem [resolvable:$true] %s77
      %83 = dma.hbm_to_vmem [thread:$0]  %s76, 512, %s78, [#allocation9], 128, 128, 8
    $region21: #{tpu_custom_call.1} parent=1 // pred_fallthru
      _
    // Predicated region
    $region22: #{tpu_custom_call.1} parent=1 // pred_check
      _
    $region23: #{tpu_custom_call.1} parent=1 // pred_check_branch
      %85 = sbr.rel (0) target = $region25
    $region24: #{tpu_custom_call.1} parent=1 // pred_region
      %87 = vsyncadd [#allocation12], 0
      %s88 = sshll.u32 %s5, 4
      %s89 = int_to_ptr.hbm [resolvable:$true] %s88
      %s90 = sshll.u32 [#allocation11], 4
      %s91 = int_to_ptr.vmem [resolvable:$true] %s90
      %96 = dma.hbm_to_vmem [thread:$0]  %s89, 512, %s91, [#allocation12], 128, 128, 8
    $region25: #{tpu_custom_call.1} parent=1 // pred_fallthru
      _
    // Predicated region
    $region26: #{tpu_custom_call.1} parent=1 // pred_check
      _
    $region27: #{tpu_custom_call.1} parent=1 // pred_check_branch
      %98 = sbr.rel (0) target = $region29
    $region28: #{tpu_custom_call.1} parent=1 // pred_region
      %100 = vsyncadd [#allocation12], 0
      %s101 = sshll.u32 %s6, 4
      %s102 = int_to_ptr.hbm [resolvable:$true] %s101
      %s103 = sshll.u32 [#allocation13], 4
      %s104 = int_to_ptr.vmem [resolvable:$true] %s103
      %109 = dma.hbm_to_vmem [thread:$0]  %s102, 512, %s104, [#allocation12], 128, 128, 8
    $region29: #{tpu_custom_call.1} parent=1 // pred_fallthru
      _
    // Predicated region
    $region30: #{tpu_custom_call.1} parent=1 // pred_check
      _
    $region31: #{tpu_custom_call.1} parent=1 // pred_check_branch
      %111 = sbr.rel (0) target = $region33
    $region32: #{tpu_custom_call.1} parent=1 // pred_region
      _
    $region33: #{tpu_custom_call.1} parent=1 // pred_fallthru
      _
    // Predicated region
    $region34: #{tpu_custom_call.1} parent=1 // pred_check
      _
    $region35: #{tpu_custom_call.1} parent=1 // pred_check_branch
      %113 = sbr.rel (0) target = $region37
    $region36: #{tpu_custom_call.1} parent=1 // pred_region
      _
    $region37: #{tpu_custom_call.1} parent=1 // pred_fallthru
      _
    // Predicated region
    $region38: #{tpu_custom_call.1} parent=1 // pred_check
      _
    $region39: #{tpu_custom_call.1} parent=1 // pred_check_branch
      %115 = sbr.rel (0) target = $region41
    $region40: #{tpu_custom_call.1} parent=1 // pred_region
      %117 = dma.done [#allocation3], 256
    $region41: #{tpu_custom_call.1} parent=1 // pred_fallthru
      _
    // Predicated region
    $region42: #{tpu_custom_call.1} parent=1 // pred_check
      _
    $region43: #{tpu_custom_call.1} parent=1 // pred_check_branch
      %119 = sbr.rel (0) target = $region45
    $region44: #{tpu_custom_call.1} parent=1 // pred_region
      %121 = dma.done [#allocation6], 256
    $region45: #{tpu_custom_call.1} parent=1 // pred_fallthru
      _
    // Predicated region
    $region46: #{tpu_custom_call.1} parent=1 // pred_check
      _
    $region47: #{tpu_custom_call.1} parent=1 // pred_check_branch
      %123 = sbr.rel (0) target = $region49
    $region48: #{tpu_custom_call.1} parent=1 // pred_region
      %125 = dma.done [#allocation6], 256
    $region49: #{tpu_custom_call.1} parent=1 // pred_fallthru
      _
    // Predicated region
    $region50: #{tpu_custom_call.1} parent=1 // pred_check
      _
    $region51: #{tpu_custom_call.1} parent=1 // pred_check_branch
      %127 = sbr.rel (0) target = $region53
    $region52: #{tpu_custom_call.1} parent=1 // pred_region
      %129 = dma.done [#allocation9], 512
    $region53: #{tpu_custom_call.1} parent=1 // pred_fallthru
      _
    // Predicated region
    $region54: #{tpu_custom_call.1} parent=1 // pred_check
      _
    $region55: #{tpu_custom_call.1} parent=1 // pred_check_branch
      %131 = sbr.rel (0) target = $region57
    $region56: #{tpu_custom_call.1} parent=1 // pred_region
      %133 = dma.done [#allocation9], 512
    $region57: #{tpu_custom_call.1} parent=1 // pred_fallthru
      _
    // Predicated region
    $region58: #{tpu_custom_call.1} parent=1 // pred_check
      _
    $region59: #{tpu_custom_call.1} parent=1 // pred_check_branch
      %135 = sbr.rel (0) target = $region61
    $region60: #{tpu_custom_call.1} parent=1 // pred_region
      %137 = dma.done [#allocation12], 512
    $region61: #{tpu_custom_call.1} parent=1 // pred_fallthru
      _
    // Predicated region
    $region62: #{tpu_custom_call.1} parent=1 // pred_check
      _
    $region63: #{tpu_custom_call.1} parent=1 // pred_check_branch
      %139 = sbr.rel (0) target = $region65
    $region64: #{tpu_custom_call.1} parent=1 // pred_region
      %141 = dma.done [#allocation12], 512
    $region65: #{tpu_custom_call.1} parent=1 // pred_fallthru
      _
    %v142 = vld [vmem:[#allocation2] sm:$0xff]
    %v143 = vld [vmem:[#allocation2 + $0x8] sm:$0xff]
    %v144 = vld [vmem:[#allocation5] sm:$0xff]
    %v145 = vld [vmem:[#allocation5 + $0x8] sm:$0xff]
    %v146 = vld [vmem:[#allocation7] sm:$0xff]
    %v147 = vld [vmem:[#allocation7 + $0x8] sm:$0xff]
    %v148 = vld [vmem:[#allocation8] sm:$0xff]
    %v149 = vld [vmem:[#allocation8 + $0x8] sm:$0xff]
    %v150 = vld [vmem:[#allocation8 + $0x10] sm:$0xff]
    %v151 = vld [vmem:[#allocation8 + $0x18] sm:$0xff]
    %vm152 = vcmask 261120
    %v154 = vsel %vm152, %v142, 0
    %v157 = vsel %vm152, %v143, 0
    %159 = vmatpush.msra.mxu0 0.0
    %160 = vmatpush.msra.mxu0 0.0
    %161 = vmatpush.msra.mxu0 0.0
    %162 = vmatpush.msra.mxu0 0.0
    %163 = vmatpush.msra.mxu0 0.0
    %164 = vmatpush.msra.mxu0 0.0
    %165 = vmatpush.msra.mxu0 0.0
    %166 = vmatpush.msra.mxu0 0.0
    %167 = vmatpush.msra.mxu0 0.0
    %168 = vmatpush.msra.mxu0 0.0
    %169 = vmatpush.msra.mxu0 0.0
    %170 = vmatpush.msra.mxu0 0.0
    %171 = vmatpush.msra.mxu0 %v151
    %172 = vmatpush.msra.mxu0 %v150
    %173 = vmatpush.msra.mxu0 %v149
    %174 = vmatpush.msra.mxu0 %v148
    %175 = vmatmul.f32.gmra.mxu0 %v154
    %v176 = vpop.f32.mrf.mxu0
    %v177 = vadd.f32 0.0, %v176
    %178 = vmatmul.f32.gmra.mxu0 %v157
    %v179 = vpop.f32.mrf.mxu0
    %v180 = vadd.f32 0.0, %v179
    %181 = vdwg.mxu0
    %v182 = vmul.f32 %v177, 0.17677669
    %v183 = vmul.f32 %v180, 0.17677669
    %v184 = vld [vmem:[#allocation10] sm:$0xff]
    %v185 = vld [vmem:[#allocation10 + $0x8] sm:$0xff]
    %v186 = vld [vmem:[#allocation10 + $0x10] sm:$0xff]
    %v187 = vld [vmem:[#allocation10 + $0x18] sm:$0xff]
    %v189 = vsel %vm152, %v144, 0
    %v192 = vsel %vm152, %v145, 0
    %194 = vmatpush.msra.mxu0 0.0
    %195 = vmatpush.msra.mxu0 0.0
    %196 = vmatpush.msra.mxu0 0.0
    %197 = vmatpush.msra.mxu0 0.0
    %198 = vmatpush.msra.mxu0 0.0
    %199 = vmatpush.msra.mxu0 0.0
    %200 = vmatpush.msra.mxu0 0.0
    %201 = vmatpush.msra.mxu0 0.0
    %202 = vmatpush.msra.mxu0 0.0
    %203 = vmatpush.msra.mxu0 0.0
    %204 = vmatpush.msra.mxu0 0.0
    %205 = vmatpush.msra.mxu0 0.0
    %206 = vmatpush.msra.mxu0 %v187
    %207 = vmatpush.msra.mxu0 %v186
    %208 = vmatpush.msra.mxu0 %v185
    %209 = vmatpush.msra.mxu0 %v184
    %210 = vmatmul.f32.gmra.mxu0 %v189
    %v211 = vpop.f32.mrf.mxu0
    %v212 = vadd.f32 0.0, %v211
    %213 = vmatmul.f32.gmra.mxu0 %v192
    %v214 = vpop.f32.mrf.mxu0
    %v215 = vadd.f32 0.0, %v214
    %216 = vdwg.mxu0
    %v217 = vld [vmem:[#allocation11] sm:$0xff]
    %v218 = vld [vmem:[#allocation11 + $0x8] sm:$0xff]
    %v219 = vld [vmem:[#allocation11 + $0x10] sm:$0xff]
    %v220 = vld [vmem:[#allocation11 + $0x18] sm:$0xff]
    %v222 = vsel %vm152, %v146, 0
    %v225 = vsel %vm152, %v147, 0
    %227 = vmatpush.msra.mxu0 0.0
    %228 = vmatpush.msra.mxu0 0.0
    %229 = vmatpush.msra.mxu0 0.0
    %230 = vmatpush.msra.mxu0 0.0
    %231 = vmatpush.msra.mxu0 0.0
    %232 = vmatpush.msra.mxu0 0.0
    %233 = vmatpush.msra.mxu0 0.0
    %234 = vmatpush.msra.mxu0 0.0
    %235 = vmatpush.msra.mxu0 0.0
    %236 = vmatpush.msra.mxu0 0.0
    %237 = vmatpush.msra.mxu0 0.0
    %238 = vmatpush.msra.mxu0 0.0
    %239 = vmatpush.msra.mxu0 %v220
    %240 = vmatpush.msra.mxu0 %v219
    %241 = vmatpush.msra.mxu0 %v218
    %242 = vmatpush.msra.mxu0 %v217
    %243 = vmatmul.f32.gmra.mxu0 %v222
    %v244 = vpop.f32.mrf.mxu0
    %v245 = vadd.f32 0.0, %v244
    %246 = vmatmul.f32.gmra.mxu0 %v225
    %v247 = vpop.f32.mrf.mxu0
    %v248 = vadd.f32 0.0, %v247
    %249 = vdwg.mxu0
    %v250 = vld [vmem:[%s8] sm:$0x1]
    %v251 = vld [vmem:[%s8 + $0x1] sm:$0x1]
    %v252 = vld [vmem:[%s8 + $0x2] sm:$0x1]
    %v253 = vld [vmem:[%s8 + $0x3] sm:$0x1]
    %v255 = vperm.slane %v250, 0
    %v257 = vmul.f32 %v182, %v255
    %v258 = vmul.f32 %v183, %v255
    %v260 = vperm.slane %v251, 0
    %v262 = vmul.f32 %v182, %v260
    %v263 = vmul.f32 %v183, %v260
    %v265 = vperm.slane %v252, 0
    %v267 = vmul.f32 %v182, %v265
    %v268 = vmul.f32 %v183, %v265
    %v270 = vperm.slane %v253, 0
    %v272 = vmul.f32 %v182, %v270
    %v273 = vmul.f32 %v183, %v270
    %v275 = vsel %vm152, %v257, 0
    %v278 = vsel %vm152, %v262, 0
    %v281 = vsel %vm152, %v267, 0
    %v284 = vsel %vm152, %v272, 0
    %v287 = vsel %vm152, %v212, 0
    %289 = vmatpush.xpose.msra.mxu0 0.0
    %290 = vmatpush.xpose.msra.mxu0 0.0
    %291 = vmatpush.xpose.msra.mxu0 0.0
    %292 = vmatpush.xpose.msra.mxu0 0.0
    %293 = vmatpush.xpose.msra.mxu0 0.0
    %294 = vmatpush.xpose.msra.mxu0 0.0
    %295 = vmatpush.xpose.msra.mxu0 0.0
    %296 = vmatpush.xpose.msra.mxu0 0.0
    %297 = vmatpush.xpose.msra.mxu0 0.0
    %298 = vmatpush.xpose.msra.mxu0 0.0
    %299 = vmatpush.xpose.msra.mxu0 0.0
    %300 = vmatpush.xpose.msra.mxu0 0.0
    %301 = vmatpush.xpose.msra.mxu0 0.0
    %302 = vmatpush.xpose.msra.mxu0 0.0
    %303 = vmatpush.xpose.msra.mxu0 0.0
    %304 = vmatpush.xpose.msra.mxu0 %v287
    %305 = vmatmul.f32.gmra.mxu0 %v275
    %v306 = vpop.f32.mrf.mxu0
    %v307 = vadd.f32 0.0, %v306
    %308 = vmatmul.f32.gmra.mxu0 %v278
    %v309 = vpop.f32.mrf.mxu0
    %v310 = vadd.f32 0.0, %v309
    %311 = vmatmul.f32.gmra.mxu0 %v281
    %v312 = vpop.f32.mrf.mxu0
    %v313 = vadd.f32 0.0, %v312
    %314 = vmatmul.f32.gmra.mxu0 %v284
    %v315 = vpop.f32.mrf.mxu0
    %v316 = vadd.f32 0.0, %v315
    %317 = vdwg.mxu0
    %v319 = vsel %vm152, %v258, 0
    %v322 = vsel %vm152, %v263, 0
    %v325 = vsel %vm152, %v268, 0
    %v328 = vsel %vm152, %v273, 0
    %v331 = vsel %vm152, %v215, 0
    %333 = vmatpush.xpose.msra.mxu0 0.0
    %334 = vmatpush.xpose.msra.mxu0 0.0
    %335 = vmatpush.xpose.msra.mxu0 0.0
    %336 = vmatpush.xpose.msra.mxu0 0.0
    %337 = vmatpush.xpose.msra.mxu0 0.0
    %338 = vmatpush.xpose.msra.mxu0 0.0
    %339 = vmatpush.xpose.msra.mxu0 0.0
    %340 = vmatpush.xpose.msra.mxu0 0.0
    %341 = vmatpush.xpose.msra.mxu0 0.0
    %342 = vmatpush.xpose.msra.mxu0 0.0
    %343 = vmatpush.xpose.msra.mxu0 0.0
    %344 = vmatpush.xpose.msra.mxu0 0.0
    %345 = vmatpush.xpose.msra.mxu0 0.0
    %346 = vmatpush.xpose.msra.mxu0 0.0
    %347 = vmatpush.xpose.msra.mxu0 0.0
    %348 = vmatpush.xpose.msra.mxu0 %v331
    %349 = vmatmul.f32.gmra.mxu0 %v319
    %v350 = vpop.f32.mrf.mxu0
    %v351 = vadd.f32 0.0, %v350
    %352 = vmatmul.f32.gmra.mxu0 %v322
    %v353 = vpop.f32.mrf.mxu0
    %v354 = vadd.f32 0.0, %v353
    %355 = vmatmul.f32.gmra.mxu0 %v325
    %v356 = vpop.f32.mrf.mxu0
    %v357 = vadd.f32 0.0, %v356
    %358 = vmatmul.f32.gmra.mxu0 %v328
    %v359 = vpop.f32.mrf.mxu0
    %v360 = vadd.f32 0.0, %v359
    %361 = vdwg.mxu0
    %vm362 = vcmask 64512
    %v363 = vsel %vm362, %v307, -inf
    %364 = vmax.xlane.f32.xlu0 %v363
    %v365 = vpop.xlane.xlu0 %364
    %v366 = vsel %vm362, %v310, -inf
    %367 = vmax.xlane.f32.xlu0 %v366
    %v368 = vpop.xlane.xlu0 %367
    %v369 = vsel %vm362, %v313, -inf
    %370 = vmax.xlane.f32.xlu0 %v369
    %v371 = vpop.xlane.xlu0 %370
    %v372 = vsel %vm362, %v316, -inf
    %373 = vmax.xlane.f32.xlu0 %v372
    %v374 = vpop.xlane.xlu0 %373
    %v375 = vsel %vm362, %v351, -inf
    %376 = vmax.xlane.f32.xlu0 %v375
    %v377 = vpop.xlane.xlu0 %376
    %v378 = vsel %vm362, %v354, -inf
    %379 = vmax.xlane.f32.xlu0 %v378
    %v380 = vpop.xlane.xlu0 %379
    %v381 = vsel %vm362, %v357, -inf
    %382 = vmax.xlane.f32.xlu0 %v381
    %v383 = vpop.xlane.xlu0 %382
    %v384 = vsel %vm362, %v360, -inf
    %385 = vmax.xlane.f32.xlu0 %v384
    %v386 = vpop.xlane.xlu0 %385
    %v387 = vsub.f32 %v307, %v365
    %v388 = vsub.f32 %v310, %v368
    %v389 = vsub.f32 %v313, %v371
    %v390 = vsub.f32 %v316, %v374
    %v391 = vsub.f32 %v351, %v377
    %v392 = vsub.f32 %v354, %v380
    %v393 = vsub.f32 %v357, %v383
    %v394 = vsub.f32 %v360, %v386
    %v395 = vmul.f32 %v387, 1.442695
    %v396 = vpow.pop %v395
    %v397 = vmul.f32 %v388, 1.442695
    %v398 = vpow.pop %v397
    %v399 = vmul.f32 %v389, 1.442695
    %v400 = vpow.pop %v399
    %v401 = vmul.f32 %v390, 1.442695
    %v402 = vpow.pop %v401
    %v403 = vmul.f32 %v391, 1.442695
    %v404 = vpow.pop %v403
    %v405 = vmul.f32 %v392, 1.442695
    %v406 = vpow.pop %v405
    %v407 = vmul.f32 %v393, 1.442695
    %v408 = vpow.pop %v407
    %v409 = vmul.f32 %v394, 1.442695
    %v410 = vpow.pop %v409
    %v411 = vsel %vm362, %v396, 0.0
    %412 = vadd.xlane.f32.xlu0 %v411
    %v413 = vpop.xlane.xlu0 %412
    %v414 = vsel %vm362, %v398, 0.0
    %415 = vadd.xlane.f32.xlu0 %v414
    %v416 = vpop.xlane.xlu0 %415
    %v417 = vsel %vm362, %v400, 0.0
    %418 = vadd.xlane.f32.xlu0 %v417
    %v419 = vpop.xlane.xlu0 %418
    %v420 = vsel %vm362, %v402, 0.0
    %421 = vadd.xlane.f32.xlu0 %v420
    %v422 = vpop.xlane.xlu0 %421
    %v423 = vsel %vm362, %v404, 0.0
    %424 = vadd.xlane.f32.xlu0 %v423
    %v425 = vpop.xlane.xlu0 %424
    %v426 = vsel %vm362, %v406, 0.0
    %427 = vadd.xlane.f32.xlu0 %v426
    %v428 = vpop.xlane.xlu0 %427
    %v429 = vsel %vm362, %v408, 0.0
    %430 = vadd.xlane.f32.xlu0 %v429
    %v431 = vpop.xlane.xlu0 %430
    %v432 = vsel %vm362, %v410, 0.0
    %433 = vadd.xlane.f32.xlu0 %v432
    %v434 = vpop.xlane.xlu0 %433
    %v435 = vrcp.pop %v413
    %v436 = vrcp.pop %v416
    %v437 = vrcp.pop %v419
    %v438 = vrcp.pop %v422
    %v439 = vrcp.pop %v425
    %v440 = vrcp.pop %v428
    %v441 = vrcp.pop %v431
    %v442 = vrcp.pop %v434
    %v443 = vmul.f32 %v396, %v435
    %v444 = vmul.f32 %v398, %v436
    %v445 = vmul.f32 %v400, %v437
    %v446 = vmul.f32 %v402, %v438
    %v447 = vmul.f32 %v404, %v439
    %v448 = vmul.f32 %v406, %v440
    %v449 = vmul.f32 %v408, %v441
    %v450 = vmul.f32 %v410, %v442
    %v452 = vsel %vm362, %v443, 0
    %v455 = vsel %vm362, %v444, 0
    %v458 = vsel %vm362, %v445, 0
    %v461 = vsel %vm362, %v446, 0
    %463 = vmatpush.msra.mxu0 0.0
    %464 = vmatpush.msra.mxu0 0.0
    %465 = vmatpush.msra.mxu0 0.0
    %466 = vmatpush.msra.mxu0 0.0
    %467 = vmatpush.msra.mxu0 0.0
    %468 = vmatpush.msra.mxu0 0.0
    %469 = vmatpush.msra.mxu0 0.0
    %470 = vmatpush.msra.mxu0 0.0
    %471 = vmatpush.msra.mxu0 0.0
    %472 = vmatpush.msra.mxu0 0.0
    %473 = vmatpush.msra.mxu0 0.0
    %474 = vmatpush.msra.mxu0 0.0
    %475 = vmatpush.msra.mxu0 0.0
    %476 = vmatpush.msra.mxu0 0.0
    %477 = vmatpush.msra.mxu0 0.0
    %478 = vmatpush.msra.mxu0 %v245
    %479 = vmatmul.f32.gmra.mxu0 %v452
    %v480 = vpop.f32.mrf.mxu0
    %v481 = vadd.f32 0.0, %v480
    %482 = vmatmul.f32.gmra.mxu0 %v455
    %v483 = vpop.f32.mrf.mxu0
    %v484 = vadd.f32 0.0, %v483
    %485 = vmatmul.f32.gmra.mxu0 %v458
    %v486 = vpop.f32.mrf.mxu0
    %v487 = vadd.f32 0.0, %v486
    %488 = vmatmul.f32.gmra.mxu0 %v461
    %v489 = vpop.f32.mrf.mxu0
    %v490 = vadd.f32 0.0, %v489
    %491 = vdwg.mxu0
    %v493 = vsel %vm362, %v447, 0
    %v496 = vsel %vm362, %v448, 0
    %v499 = vsel %vm362, %v449, 0
    %v502 = vsel %vm362, %v450, 0
    %504 = vmatpush.msra.mxu0 0.0
    %505 = vmatpush.msra.mxu0 0.0
    %506 = vmatpush.msra.mxu0 0.0
    %507 = vmatpush.msra.mxu0 0.0
    %508 = vmatpush.msra.mxu0 0.0
    %509 = vmatpush.msra.mxu0 0.0
    %510 = vmatpush.msra.mxu0 0.0
    %511 = vmatpush.msra.mxu0 0.0
    %512 = vmatpush.msra.mxu0 0.0
    %513 = vmatpush.msra.mxu0 0.0
    %514 = vmatpush.msra.mxu0 0.0
    %515 = vmatpush.msra.mxu0 0.0
    %516 = vmatpush.msra.mxu0 0.0
    %517 = vmatpush.msra.mxu0 0.0
    %518 = vmatpush.msra.mxu0 0.0
    %519 = vmatpush.msra.mxu0 %v248
    %520 = vmatmul.f32.gmra.mxu0 %v493
    %v521 = vpop.f32.mrf.mxu0
    %v522 = vadd.f32 0.0, %v521
    %523 = vmatmul.f32.gmra.mxu0 %v496
    %v524 = vpop.f32.mrf.mxu0
    %v525 = vadd.f32 0.0, %v524
    %526 = vmatmul.f32.gmra.mxu0 %v499
    %v527 = vpop.f32.mrf.mxu0
    %v528 = vadd.f32 0.0, %v527
    %529 = vmatmul.f32.gmra.mxu0 %v502
    %v530 = vpop.f32.mrf.mxu0
    %v531 = vadd.f32 0.0, %v530
    %532 = vdwg.mxu0
    %v533 = vmul.f32 %v481, %v255
    %v534 = vmul.f32 %v522, %v255
    %v535 = vmul.f32 %v484, %v260
    %v536 = vmul.f32 %v525, %v260
    %v537 = vadd.f32 %v533, %v535
    %v538 = vadd.f32 %v534, %v536
    %v539 = vmul.f32 %v487, %v265
    %v540 = vmul.f32 %v528, %v265
    %v541 = vadd.f32 %v537, %v539
    %v542 = vadd.f32 %v538, %v540
    %v543 = vmul.f32 %v490, %v270
    %v544 = vmul.f32 %v531, %v270
    %v545 = vadd.f32 %v541, %v543
    %v546 = vadd.f32 %v542, %v544
    %v547 = vld [vmem:[#allocation13] sm:$0xff]
    %v548 = vld [vmem:[#allocation13 + $0x8] sm:$0xff]
    %v549 = vld [vmem:[#allocation13 + $0x10] sm:$0xff]
    %v550 = vld [vmem:[#allocation13 + $0x18] sm:$0xff]
    %v551 = vld [vmem:[%s7] sm:$0x1]
    %v553 = vperm.slane %v551, 0
    %v556 = vsel %vm152, %v545, 0
    %v559 = vsel %vm152, %v546, 0
    %561 = vmatpush.msra.mxu0 0.0
    %562 = vmatpush.msra.mxu0 0.0
    %563 = vmatpush.msra.mxu0 0.0
    %564 = vmatpush.msra.mxu0 0.0
    %565 = vmatpush.msra.mxu0 0.0
    %566 = vmatpush.msra.mxu0 0.0
    %567 = vmatpush.msra.mxu0 0.0
    %568 = vmatpush.msra.mxu0 0.0
    %569 = vmatpush.msra.mxu0 0.0
    %570 = vmatpush.msra.mxu0 0.0
    %571 = vmatpush.msra.mxu0 0.0
    %572 = vmatpush.msra.mxu0 0.0
    %573 = vmatpush.msra.mxu0 %v550
    %574 = vmatpush.msra.mxu0 %v549
    %575 = vmatpush.msra.mxu0 %v548
    %576 = vmatpush.msra.mxu0 %v547
    %577 = vmatmul.f32.gmra.mxu0 %v556
    %v578 = vpop.f32.mrf.mxu0
    %v579 = vadd.f32 %v553, %v578
    %580 = vmatmul.f32.gmra.mxu0 %v559
    %v581 = vpop.f32.mrf.mxu0
    %v582 = vadd.f32 %v553, %v581
    %583 = vdwg.mxu0
    %584 = vst.msk [vmem:[#allocation14] sm:$0xff] %vm152, %v579
    %585 = vst.msk [vmem:[#allocation14 + $0x8] sm:$0xff] %vm152, %v582
    // Predicated region
    $region66: #{tpu_custom_call.1} parent=1 // pred_check
      _
    $region67: #{tpu_custom_call.1} parent=1 // pred_check_branch
      %587 = sbr.rel (0) target = $region69
    $region68: #{tpu_custom_call.1} parent=1 // pred_region
      %589 = vsyncadd [#allocation4], 0
      %s590 = sshll.u32 [#allocation14], 4
      %s591 = int_to_ptr.vmem [resolvable:$true] %s590
      %s592 = sshll.u32 %s9, 4
      %s593 = int_to_ptr.hbm [resolvable:$true] %s592
      %598 = dma.vmem_to_hbm [thread:$0]  %s591, 256, %s593, [#allocation4], 128, 128, 8
    $region69: #{tpu_custom_call.1} parent=1 // pred_fallthru
      _
    // Predicated region
    $region70: #{tpu_custom_call.1} parent=1 // pred_check
      _
    $region71: #{tpu_custom_call.1} parent=1 // pred_check_branch
      %600 = sbr.rel (0) target = $region73
    $region72: #{tpu_custom_call.1} parent=1 // pred_region
      %602 = dma.done [#allocation4], 256
    $region73: #{tpu_custom_call.1} parent=1 // pred_fallthru
      _
    %603 = vsyncpa [#allocation3], 1
    %604 = vsyncpa [#allocation6], 1
    %605 = vsyncpa [#allocation9], 1
    %606 = vsyncpa [#allocation12], 1
    %607 = vsyncpa [#allocation4], 1

</llo_original>
